<compile_context>
chip_gen: v7x
topology: tpu7x:2x2x1
jax: 0.10.0
libtpu: 0.0.40
codegen_flags: <defaults>
</compile_context>

<pallas_src>
import numpy as np
import jax
import jax.numpy as jnp
from jax.experimental import pallas as pl
from jax.experimental.pallas import tpu as pltpu


def _round_up(x, m):
    return ((x + m - 1) // m) * m


# --------------------------------------------------------------------------
# Kernel 1: batched HardTreeSupLoss.get_output_sub for ALL nodes at once.
#   outputs_sub_all = outputs @ M_all,
#   M_all[c, off_k + j] = 1/|group_j of node k|  if class c is in that group.
# Lane-dense: K is padded to a multiple of 128 so stores are unmasked.
# --------------------------------------------------------------------------
def _node_group_mean_kernel(x_ref, m_ref, out_ref):
    out_ref[...] = jnp.dot(x_ref[...], m_ref[...],
                           preferred_element_type=jnp.float32)


def batched_node_inference(outputs, group_matrix, tile_rows=256):
    n, c = outputs.shape
    c_m, k = group_matrix.shape
    assert c == c_m
    c_pad = _round_up(c, 128)
    k_pad = _round_up(k, 128)
    tm = int(min(_round_up(tile_rows, 8), _round_up(max(n, 1), 8)))
    n_pad = _round_up(max(n, 1), tm)

    x = jnp.pad(outputs.astype(jnp.float32), ((0, n_pad - n), (0, c_pad - c)))
    m = jnp.pad(group_matrix.astype(jnp.float32),
                ((0, c_pad - c), (0, k_pad - k)))

    out = pl.pallas_call(
        _node_group_mean_kernel,
        out_shape=jax.ShapeDtypeStruct((n_pad, k_pad), jnp.float32),
        grid_spec=pltpu.PrefetchScalarGridSpec(
            num_scalar_prefetch=0,
            grid=(n_pad // tm,),
            in_specs=[pl.BlockSpec((tm, c_pad), lambda i: (i, 0)),
                      pl.BlockSpec((c_pad, k_pad), lambda i: (0, 0))],
            out_specs=pl.BlockSpec((tm, k_pad), lambda i: (i, 0)),
        ),
        compiler_params=pltpu.CompilerParams(
            dimension_semantics=("parallel",)),
    )(x, m)
    return out[:n, :k]


# --------------------------------------------------------------------------
# Kernel 2: nn.KLDivLoss() (reduction='mean'):
#   mean over all elements of  target * (log(target) - input)
# Inputs are flattened to lane-dense [rows, 128] blocks; each grid step adds
# its pointwise terms into a persistent VMEM accumulator; the single XLU
# reduce + SMEM scalar store happens only on the last step.
# --------------------------------------------------------------------------
def _kl_sum_kernel(x_ref, t_ref, out_ref, acc_ref):
    @pl.when(pl.program_id(0) == 0)
    def _():
        acc_ref[...] = jnp.zeros_like(acc_ref)

    x = x_ref[...]
    t = t_ref[...]
    mask = t > 0.0
    log_t = jnp.log(jnp.where(mask, t, 1.0))      # guard: no 0*log(0) NaN
    acc_ref[...] += jnp.where(mask, t * (log_t - x), 0.0)

    @pl.when(pl.program_id(0) == pl.num_programs(0) - 1)
    def _():
        out_ref[0, 0] = jnp.sum(acc_ref[...])


def kl_div_mean(inp, target, tile_rows=1024):
    assert inp.shape == target.shape
    numel = int(np.prod(inp.shape))
    lanes = 128
    rows = max(1, -(-numel // lanes))
    tr = int(min(_round_up(tile_rows, 8), _round_up(rows, 8)))
    rows_pad = _round_up(rows, tr)
    e_pad = rows_pad * lanes

    # zero-padded target elements contribute exactly 0 to the sum
    x = jnp.pad(inp.astype(jnp.float32).reshape(-1),
                (0, e_pad - numel)).reshape(rows_pad, lanes)
    t = jnp.pad(target.astype(jnp.float32).reshape(-1),
                (0, e_pad - numel)).reshape(rows_pad, lanes)

    total = pl.pallas_call(
        _kl_sum_kernel,
        out_shape=jax.ShapeDtypeStruct((1, 1), jnp.float32),
        grid_spec=pltpu.PrefetchScalarGridSpec(
            num_scalar_prefetch=0,
            grid=(rows_pad // tr,),
            in_specs=[pl.BlockSpec((tr, lanes), lambda i: (i, 0)),
                      pl.BlockSpec((tr, lanes), lambda i: (i, 0))],
            out_specs=pl.BlockSpec((1, 1), lambda i: (0, 0),
                                   memory_space=pltpu.MemorySpace.SMEM),
            scratch_shapes=[pltpu.VMEM((tr, lanes), jnp.float32)],
        ),
        compiler_params=pltpu.CompilerParams(
            dimension_semantics=("arbitrary",)),
    )(x, t)
    return total[0, 0] / float(numel)


# --------------------------------------------------------------------------
# Synthetic NBDT tree: deterministic balanced binary split of the classes.
# Each node: leaves (old classes under it), children (old-class groups per
# new class), num_classes == len(children) == 2.
# --------------------------------------------------------------------------
def build_binary_nodes(num_classes):
    nodes = []

    def rec(group):
        if len(group) <= 1:
            return
        mid = len(group) // 2
        left, right = group[:mid], group[mid:]
        nodes.append({"leaves": list(group),
                      "children": [list(left), list(right)]})
        rec(left)
        rec(right)

    rec(list(range(num_classes)))
    return nodes


# --------------------------------------------------------------------------
# HardAttentionLoss.forward
# --------------------------------------------------------------------------
def hard_attention_loss(outputs, targets, nodes, num_classes, heat_hw=8,
                        tree_supervision_weight=1.0, cam_key=None,
                        check_numerics=False):
    if cam_key is None:
        cam_key = jax.random.PRNGKey(1)
    N = outputs.shape[0]
    num_losses = N * len(nodes) / 2.0
    P = heat_hw * heat_hw
    targets_np = np.asarray(jax.device_get(targets)).astype(np.int64)

    # ---- single batched node inference over the whole tree ----------------
    # (get_output_sub is a row-wise linear map, so computing it on the full
    #  batch and slicing selected rows per node is numerically identical to
    #  the original's per-node outputs[selector] @ M.)
    k_total = sum(len(node["children"]) for node in nodes)
    m_all = np.zeros((num_classes, max(k_total, 1)), np.float32)
    col_off = []
    off = 0
    for node in nodes:
        col_off.append(off)
        for k, grp in enumerate(node["children"]):
            m_all[np.array(grp), off + k] = 1.0 / len(grp)
        off += len(node["children"])
    sub_all = batched_node_inference(outputs, jnp.asarray(m_all))

    outputs_subs, targets_subs = {}, {}
    cams_subs_1, cams_subs_2 = {}, {}
    loss = None

    for node_idx, node in enumerate(nodes):
        leaves, children = node["leaves"], node["children"]
        selector = np.isin(targets_np, np.array(leaves))
        sel_idx = np.nonzero(selector)[0]
        n_sub = int(sel_idx.shape[0])
        if n_sub == 0:
            continue

        nc = len(children)
        off = col_off[node_idx]
        outputs_sub = sub_all[jnp.asarray(sel_idx)][:, off:off + nc]

        t_sub = np.array(
            [next(k for k, g in enumerate(children) if int(t) in g)
             for t in targets_np[sel_idx]], np.int32)

        # TODO(synk): self.gcam.forward / .backward / .generate (GradCAM through
        # an external CNN with autograd hooks) has no Pallas equivalent; the CAM
        # heatmaps `regions[j, 0]` are synthesized deterministically, and the
        # F.softmax(outputs_sub) that only feeds GradCAM is elided.
        cam_key, sub_key = jax.random.split(cam_key)
        regions = jax.random.uniform(sub_key, (nc * n_sub, P), jnp.float32,
                                     minval=1e-3, maxval=1.0)
        # flat indices into the (nc, n_sub) grid, ordered (i, then j) like the
        # original's nested loops
        idx1, idx0 = [], []
        for i in range(nc):
            eq = t_sub == i
            idx1.extend((i * n_sub + np.nonzero(eq)[0]).tolist())   # t_sub[j]==i
            idx0.extend((i * n_sub + np.nonzero(~eq)[0]).tolist())  # t_sub[j]!=i
        n0, n1 = len(idx0), len(idx1)
        if n0 == 0 or n1 == 0:
            continue
        cams_1 = regions[jnp.asarray(np.array(idx0, np.int32))]
        cams_2 = regions[jnp.asarray(np.array(idx1, np.int32))]

        key = nc
        outputs_subs.setdefault(key, []).append(outputs_sub)
        targets_subs.setdefault(key, []).extend(list(t_sub))
        cams_subs_1.setdefault(key, []).append(cams_1)
        cams_subs_2.setdefault(key, []).append(cams_2)

    for key in outputs_subs:
        outputs_sub = jnp.concatenate(outputs_subs[key], axis=0)
        cams_sub_1 = jnp.concatenate(cams_subs_1[key], axis=0)
        cams_sub_2 = jnp.concatenate(cams_subs_2[key], axis=0)
        if outputs_sub.shape[0] == 0:
            continue
        fraction = (outputs_sub.shape[0] / float(num_losses)
                    * tree_supervision_weight)
        # (the original overwrites `loss =` per key; reproduced faithfully)
        loss = kl_div_mean(cams_sub_1, cams_sub_2) * fraction

        if check_numerics:  # debug only: forces a device->host sync per key
            c1, c2 = np.asarray(cams_sub_1), np.asarray(cams_sub_2)
            ref = np.mean(np.where(c2 > 0, c2 * (np.log(c2) - c1), 0.0)) * fraction
            np.testing.assert_allclose(np.asarray(loss), ref,
                                       rtol=1e-4, atol=1e-6)

    return loss


if __name__ == "__main__":
    num_classes = 8
    N = 16
    heat_hw = 8

    k0, k1, k2 = jax.random.split(jax.random.PRNGKey(0), 3)
    outputs = jax.random.normal(k0, (N, num_classes), jnp.float32)
    # every class appears (deterministically permuted) so all nodes are hit
    targets = jax.random.permutation(k1, jnp.arange(N, dtype=jnp.int32) % num_classes)

    nodes = build_binary_nodes(num_classes)

    loss = hard_attention_loss(outputs, targets, nodes, num_classes,
                               heat_hw=heat_hw, tree_supervision_weight=1.0,
                               cam_key=k2, check_numerics=True)
    jax.block_until_ready(loss)
    print("KERNEL_OK")
</pallas_src>

<mosaic_0001>
module attributes {stable_mosaic.version = 11 : i64} {
  func.func @_node_group_mean_kernel(%arg0: i32, %arg1: memref<16x128xf32, #tpu.memory_space<vmem>>, %arg2: memref<128x128xf32, #tpu.memory_space<vmem>>, %arg3: memref<16x128xf32, #tpu.memory_space<vmem>>) attributes {dimension_semantics = [#tpu.dimension_semantics<parallel>], iteration_bounds = array<i64: 1>, scalar_prefetch = 0 : i64, scratch_operands = 0 : i64, tpu.core_type = #tpu.core_type<tc>, window_params = [{transform_indices = @transform_0, window_bounds = array<i64: 16, 128>}, {pipeline_mode = #tpu.pipeline_mode<synchronous>, transform_indices = @transform_1, window_bounds = array<i64: 128, 128>}, {transform_indices = @transform_2, window_bounds = array<i64: 16, 128>}]} {
    %c0 = arith.constant 0 : index
    %c0_0 = arith.constant 0 : index
    %0 = vector.load %arg1[%c0, %c0_0] : memref<16x128xf32, #tpu.memory_space<vmem>>, vector<16x128xf32>
    %c0_1 = arith.constant 0 : index
    %c0_2 = arith.constant 0 : index
    %1 = vector.load %arg2[%c0_1, %c0_2] : memref<128x128xf32, #tpu.memory_space<vmem>>, vector<128x128xf32>
    %cst = arith.constant dense<0.000000e+00> : vector<16x128xf32>
    %2 = tpu.matmul %0, %1, %cst {dimension_numbers = #tpu.dot_dimension_numbers<[1], [0], [0], [1], [0, 0, 1, 1], [], []>} : vector<16x128xf32>, vector<128x128xf32>, vector<16x128xf32> -> vector<16x128xf32>
    %c0_3 = arith.constant 0 : index
    %c0_4 = arith.constant 0 : index
    %3 = vector.load %arg3[%c0_3, %c0_4] : memref<16x128xf32, #tpu.memory_space<vmem>>, vector<16x128xf32>
    tpu.vector_store %arg3[%c0_3, %c0_4], %2 {strides = array<i32>} : memref<16x128xf32, #tpu.memory_space<vmem>>, vector<16x128xf32>,
    return
  }
  func.func @transform_0(%arg0: i32) -> (i32, i32) {
    %c0_i32 = arith.constant 0 : i32
    %c0_i32_0 = arith.constant 0 : i32
    return %arg0, %c0_i32 : i32, i32
  }
  func.func @transform_1(%arg0: i32) -> (i32, i32) {
    %c0_i32 = arith.constant 0 : i32
    %c0_i32_0 = arith.constant 0 : i32
    %c0_i32_1 = arith.constant 0 : i32
    return %c0_i32, %c0_i32_0 : i32, i32
  }
  func.func @transform_2(%arg0: i32) -> (i32, i32) {
    %c0_i32 = arith.constant 0 : i32
    %c0_i32_0 = arith.constant 0 : i32
    return %arg0, %c0_i32 : i32, i32
  }
}

</mosaic_0001>

<llo_original>
// kernel: tpu_custom_call.1
$region0: #{tpu_custom_call.1}
  #allocation0 [shape = 'u32[]', space=smem, size = 0x4, offset = 0x4, fixed_abs, tag = 'smem constant byte address 0x4 - core index']
  #allocation1 [shape = 'u32[144,128]{1,0:T(1,128)}', space=vmem, size = 0x12000, scoped, tag = 'internal scratch']
  %s0 = inlined_call_operand.hbm [shape: f32[16,128], index: 0, kind: input, shape index: {}]
  %s1 = inlined_call_operand.hbm [shape: f32[128,128], index: 1, kind: input, shape index: {}]
  %s2 = inlined_call_operand.hbm [shape: f32[16,128], index: 2, kind: output, shape index: {}]
  %s3 = sld [smem:[#allocation0]]
  $region26: #{tpu_custom_call.1} parent=0
    _
  %s5 = ssub.s32 1, %s3
  %s6 = scalar_select 0, %s5, %s3
  $region1: #{tpu_custom_call.1} parent=0
    #allocation2 [shape = 'u8[8192]{0}', space=vmem, size = 0x2000, scoped, tag = 'input window, operand 0, single buffered']
    #allocation3 [shape = 's32[1]{0}', space=sflag, size = 0x4, scoped, tag = 'scoped memory for tpu_custom_call.1']
    #allocation4 [shape = 's32[1]{0}', space=sflag, size = 0x4, scoped, tag = 'scoped memory for tpu_custom_call.1']
    #allocation5 [shape = 'u8[65536]{0}', space=vmem, size = 0x10000, scoped, tag = 'input window, operand 1, single buffered']
    #allocation6 [shape = 's32[1]{0}', space=sflag, size = 0x4, scoped, tag = 'scoped memory for tpu_custom_call.1']
    #allocation7 [shape = 'u8[8192]{0}', space=vmem, size = 0x2000, scoped, tag = 'output window, operand 0, single buffered']
    %7 = vsyncpa [#allocation3], 0
    %8 = vsyncpa [#allocation6], 0
    %9 = vsyncpa [#allocation4], 0
    // Predicated region
    $region2: #{tpu_custom_call.1} parent=1 // pred_check
      _
    $region3: #{tpu_custom_call.1} parent=1 // pred_check_branch
      %11 = sbr.rel (0) target = $region5
    $region4: #{tpu_custom_call.1} parent=1 // pred_region
      %s13 = ssub.s32 256, 256
      %14 = vsyncadd [#allocation3], %s13
      %s15 = sshll.u32 [#allocation2], 4
      %s16 = int_to_ptr.vmem [resolvable:$true] %s15
      %21 = dma.hbm_to_vmem [thread:$0]  %s0, 256, %s16, [#allocation3], 128, 128, 8
    $region5: #{tpu_custom_call.1} parent=1 // pred_fallthru
      _
    // Predicated region
    $region6: #{tpu_custom_call.1} parent=1 // pred_check
      _
    $region7: #{tpu_custom_call.1} parent=1 // pred_check_branch
      %23 = sbr.rel (0) target = $region9
    $region8: #{tpu_custom_call.1} parent=1 // pred_region
      %s25 = ssub.s32 2048, 2048
      %26 = vsyncadd [#allocation6], %s25
      %s27 = sshll.u32 [#allocation5], 4
      %s28 = int_to_ptr.vmem [resolvable:$true] %s27
      %33 = dma.hbm_to_vmem [thread:$0]  %s1, 2048, %s28, [#allocation6], 128, 128, 8
    $region9: #{tpu_custom_call.1} parent=1 // pred_fallthru
      _
    // Predicated region
    $region10: #{tpu_custom_call.1} parent=1 // pred_check
      _
    $region11: #{tpu_custom_call.1} parent=1 // pred_check_branch
      %35 = sbr.rel (0) target = $region13
    $region12: #{tpu_custom_call.1} parent=1 // pred_region
      %36 = dma.done [#allocation3], 256
    $region13: #{tpu_custom_call.1} parent=1 // pred_fallthru
      _
    // Predicated region
    $region14: #{tpu_custom_call.1} parent=1 // pred_check
      _
    $region15: #{tpu_custom_call.1} parent=1 // pred_check_branch
      %38 = sbr.rel (0) target = $region17
    $region16: #{tpu_custom_call.1} parent=1 // pred_region
      %39 = dma.done [#allocation6], 2048
    $region17: #{tpu_custom_call.1} parent=1 // pred_fallthru
      _
    %v40 = vld [vmem:[#allocation2] sm:$0xff]
    %v41 = vld [vmem:[#allocation2 + $0x8] sm:$0xff]
    %v42 = vld [vmem:[#allocation5] sm:$0xff]
    %v43 = vld [vmem:[#allocation5 + $0x8] sm:$0xff]
    %v44 = vld [vmem:[#allocation5 + $0x10] sm:$0xff]
    %v45 = vld [vmem:[#allocation5 + $0x18] sm:$0xff]
    %v46 = vld [vmem:[#allocation5 + $0x20] sm:$0xff]
    %v47 = vld [vmem:[#allocation5 + $0x28] sm:$0xff]
    %v48 = vld [vmem:[#allocation5 + $0x30] sm:$0xff]
    %v49 = vld [vmem:[#allocation5 + $0x38] sm:$0xff]
    %v50 = vld [vmem:[#allocation5 + $0x40] sm:$0xff]
    %v51 = vld [vmem:[#allocation5 + $0x48] sm:$0xff]
    %v52 = vld [vmem:[#allocation5 + $0x50] sm:$0xff]
    %v53 = vld [vmem:[#allocation5 + $0x58] sm:$0xff]
    %v54 = vld [vmem:[#allocation5 + $0x60] sm:$0xff]
    %v55 = vld [vmem:[#allocation5 + $0x68] sm:$0xff]
    %v56 = vld [vmem:[#allocation5 + $0x70] sm:$0xff]
    %v57 = vld [vmem:[#allocation5 + $0x78] sm:$0xff]
    %58 = vmatprep.subr.mxu0 0.0
    %59 = vmatpush1.msra.mxu0 %v42
    %60 = vmatprep.subr.mxu0 0.0
    %61 = vmatpush1.msra.mxu0 %v43
    %62 = vmatprep.subr.mxu0 0.0
    %63 = vmatpush1.msra.mxu0 %v44
    %64 = vmatprep.subr.mxu0 0.0
    %65 = vmatpush1.msra.mxu0 %v45
    %66 = vmatprep.subr.mxu0 0.0
    %67 = vmatpush1.msra.mxu0 %v46
    %68 = vmatprep.subr.mxu0 0.0
    %69 = vmatpush1.msra.mxu0 %v47
    %70 = vmatprep.subr.mxu0 0.0
    %71 = vmatpush1.msra.mxu0 %v48
    %72 = vmatprep.subr.mxu0 0.0
    %73 = vmatpush1.msra.mxu0 %v49
    %74 = vmatprep.subr.mxu0 0.0
    %75 = vmatpush1.msra.mxu0 %v50
    %76 = vmatprep.subr.mxu0 0.0
    %77 = vmatpush1.msra.mxu0 %v51
    %78 = vmatprep.subr.mxu0 0.0
    %79 = vmatpush1.msra.mxu0 %v52
    %80 = vmatprep.subr.mxu0 0.0
    %81 = vmatpush1.msra.mxu0 %v53
    %82 = vmatprep.subr.mxu0 0.0
    %83 = vmatpush1.msra.mxu0 %v54
    %84 = vmatprep.subr.mxu0 0.0
    %85 = vmatpush1.msra.mxu0 %v55
    %86 = vmatprep.subr.mxu0 0.0
    %87 = vmatpush1.msra.mxu0 %v56
    %88 = vmatprep.subr.mxu0 0.0
    %89 = vmatpush1.msra.mxu0 %v57
    %90 = vmatprep.subr.mxu0 0.0
    %91 = vmatpush1.msra.mxu0 0.0
    %92 = vmatprep.subr.mxu0 0.0
    %93 = vmatpush1.msra.mxu0 0.0
    %94 = vmatprep.subr.mxu0 0.0
    %95 = vmatpush1.msra.mxu0 0.0
    %96 = vmatprep.subr.mxu0 0.0
    %97 = vmatpush1.msra.mxu0 0.0
    %98 = vmatprep.subr.mxu0 0.0
    %99 = vmatpush1.msra.mxu0 0.0
    %100 = vmatprep.subr.mxu0 0.0
    %101 = vmatpush1.msra.mxu0 0.0
    %102 = vmatprep.subr.mxu0 0.0
    %103 = vmatpush1.msra.mxu0 0.0
    %104 = vmatprep.subr.mxu0 0.0
    %105 = vmatpush1.msra.mxu0 0.0
    %106 = vmatprep.subr.mxu0 0.0
    %107 = vmatpush1.msra.mxu0 0.0
    %108 = vmatprep.subr.mxu0 0.0
    %109 = vmatpush1.msra.mxu0 0.0
    %110 = vmatprep.subr.mxu0 0.0
    %111 = vmatpush1.msra.mxu0 0.0
    %112 = vmatprep.subr.mxu0 0.0
    %113 = vmatpush1.msra.mxu0 0.0
    %114 = vmatprep.subr.mxu0 0.0
    %115 = vmatpush1.msra.mxu0 0.0
    %116 = vmatprep.subr.mxu0 0.0
    %117 = vmatpush1.msra.mxu0 0.0
    %118 = vmatprep.subr.mxu0 0.0
    %119 = vmatpush1.msra.mxu0 0.0
    %120 = vmatprep.subr.mxu0 0.0
    %121 = vmatpush1.msra.mxu0 0.0
    %122 = vmatprep.mubr.f32.mxu0 0.0
    %123 = vmatmul.mubr.f32.gmra.mrb[0].mxu0 %v40
    %v124 = vpop.f32.mrb[0].mxu0
    %v125 = vadd.f32 0.0, %v124
    %v126 = vpop.f32.mrb[0].mxu0
    %127 = vmatprep.mubr.f32.mxu0 0.0
    %128 = vmatmul.mubr.f32.gmra.mrb[0].mxu0 %v41
    %v129 = vpop.f32.mrb[0].mxu0
    %v130 = vadd.f32 0.0, %v129
    %v131 = vpop.f32.mrb[0].mxu0
    %132 = vdwg.mxu0
    %133 = vst [vmem:[#allocation7] sm:$0xff] %v125
    %134 = vst [vmem:[#allocation7 + $0x8] sm:$0xff] %v130
    // Predicated region
    $region18: #{tpu_custom_call.1} parent=1 // pred_check
      _
    $region19: #{tpu_custom_call.1} parent=1 // pred_check_branch
      %136 = sbr.rel (0) target = $region21
    $region20: #{tpu_custom_call.1} parent=1 // pred_region
      %s138 = ssub.s32 256, 256
      %139 = vsyncadd [#allocation4], %s138
      %s140 = sshll.u32 [#allocation7], 4
      %s141 = int_to_ptr.vmem [resolvable:$true] %s140
      %146 = dma.vmem_to_hbm [thread:$0]  %s141, 256, %s2, [#allocation4], 128, 128, 8
    $region21: #{tpu_custom_call.1} parent=1 // pred_fallthru
      _
    // Predicated region
    $region22: #{tpu_custom_call.1} parent=1 // pred_check
      _
    $region23: #{tpu_custom_call.1} parent=1 // pred_check_branch
      %148 = sbr.rel (0) target = $region25
    $region24: #{tpu_custom_call.1} parent=1 // pred_region
      %149 = dma.done [#allocation4], 256
    $region25: #{tpu_custom_call.1} parent=1 // pred_fallthru
      _
    %150 = vsyncpa [#allocation3], 1
    %151 = vsyncpa [#allocation6], 1
    %152 = vsyncpa [#allocation4], 1

</llo_original>
